<compile_context>
chip_gen: v5e
topology: v5e:2x2
jax: 0.10.0
libtpu: 0.0.40
codegen_flags: <defaults>
</compile_context>

<pallas_src>
import numpy as np
import jax
import jax.numpy as jnp
from jax import lax
from jax.experimental import pallas as pl
from jax.experimental.pallas import tpu as pltpu

LANE = 128            # vreg lane width; time runs lane-major within a row
SUB_ROWS = 128        # rows per in-kernel sub-block (size of the triangular masks)
MAX_BLOCK_ROWS = 2048  # rows streamed per grid step: 2 inputs x 2 bufs x 1 MiB = 4 MiB VMEM


def _round_up(x, m):
    return ((x + m - 1) // m) * m


def _make_kernel(sub, num_sub):
    """Kernel body for a chunk of (num_sub * sub, LANE) rows, streamed in reverse time."""

    def kernel(gamma_ref, probs_ref, rewards_ref, out_ref, acc_ref, carry_ref):
        c = pl.program_id(0)
        nc = pl.num_programs(0)

        @pl.when(c == 0)
        def _init():
            acc_ref[...] = jnp.zeros_like(acc_ref)
            carry_ref[...] = jnp.zeros_like(carry_ref)

        gamma = gamma_ref[0, 0]                           # SMEM scalar

        # Strict-"future" triangular ones masks (a handful of VPU ops; MXU operands):
        #   lane_mask[k, j] = 1 iff k > j -> (r @ lane_mask)[i, j] = sum_{k > j} r[i, k]
        #   row_mask[i, k]  = 1 iff k > i -> (row_mask @ x)[i]     = sum_{k > i} x[k]
        la = lax.broadcasted_iota(jnp.int32, (LANE, LANE), 0)
        lb = lax.broadcasted_iota(jnp.int32, (LANE, LANE), 1)
        lane_mask = jnp.where(la > lb, 1.0, 0.0).astype(jnp.float32)
        ra = lax.broadcasted_iota(jnp.int32, (sub, sub), 0)
        rb = lax.broadcasted_iota(jnp.int32, (sub, sub), 1)
        row_mask = jnp.where(rb > ra, 1.0, 0.0).astype(jnp.float32)

        # Sum of all rewards strictly after the trajectory slice currently processed
        # (chunks are streamed last -> first, so this is exactly the discounted tail).
        suffix_carry = carry_ref[...]                     # (1, 1)
        prod_acc = jnp.zeros((1, LANE), jnp.float32)      # deferred-reduction accumulator

        # Walk the sub-blocks of this chunk in reverse time order (static unroll).
        for s in reversed(range(num_sub)):
            row0 = s * sub
            r = rewards_ref[pl.ds(row0, sub), :]          # (sub, LANE); padding = 0.0
            lp = jnp.log(probs_ref[pl.ds(row0, sub), :])  # padding probs = 1.0 -> logp 0

            # Exclusive suffix of rewards inside this sub-block, via the idle MXU:
            lane_suf = jnp.dot(r, lane_mask, preferred_element_type=jnp.float32)
            row_tot = jnp.sum(r, axis=1, keepdims=True)   # (sub, 1)
            row_suf = jnp.dot(row_mask, jnp.broadcast_to(row_tot, (sub, LANE)),
                              preferred_element_type=jnp.float32)

            rewards_t = r + gamma * (lane_suf + row_suf + suffix_carry)
            prod_acc = prod_acc + jnp.sum(lp * rewards_t, axis=0, keepdims=True)
            suffix_carry = suffix_carry + jnp.sum(row_tot, axis=0, keepdims=True)

        acc_ref[...] += prod_acc                          # (1, 128) lane accumulator
        carry_ref[...] = suffix_carry                     # now includes this chunk

        @pl.when(c == nc - 1)
        def _finalize():
            out_ref[...] = -jnp.sum(acc_ref[...], axis=1, keepdims=True)

    return kernel


def reinforce_loss(probs, rewards, gamma):
    """Vanilla REINFORCE loss (no baseline) for a single trajectory.

    probs, rewards: 1-D arrays of length T (probs must be > 0); gamma: python scalar.
    """
    probs = jnp.asarray(probs, jnp.float32).reshape(-1)
    rewards = jnp.asarray(rewards, jnp.float32).reshape(-1)
    t = int(probs.shape[0])

    # Lane-dense layout: pad (probs -> 1.0, rewards -> 0.0) and reshape to (rows, 128).
    # (The pad is required to reach an (8,128)-tileable shape for T not multiple of 128.)
    rows_needed = int(pl.cdiv(t, LANE))
    if rows_needed >= MAX_BLOCK_ROWS:
        block_rows = MAX_BLOCK_ROWS
    elif rows_needed <= SUB_ROWS:
        block_rows = max(8, _round_up(rows_needed, 8))
    else:
        block_rows = _round_up(rows_needed, SUB_ROWS)
    sub = min(SUB_ROWS, block_rows)
    num_sub = block_rows // sub
    num_chunks = int(pl.cdiv(rows_needed, block_rows))
    total_rows = num_chunks * block_rows
    pad = total_rows * LANE - t

    probs_p = jnp.pad(probs, (0, pad), constant_values=1.0).reshape(total_rows, LANE)
    rewards_p = jnp.pad(rewards, (0, pad), constant_values=0.0).reshape(total_rows, LANE)
    gamma_arr = jnp.asarray(gamma, jnp.float32).reshape(1, 1)

    kernel = _make_kernel(sub, num_sub)

    out = pl.pallas_call(
        kernel,
        out_shape=jax.ShapeDtypeStruct((1, 1), jnp.float32),
        grid_spec=pltpu.PrefetchScalarGridSpec(
            num_scalar_prefetch=0,
            grid=(num_chunks,),
            in_specs=[
                pl.BlockSpec(memory_space=pltpu.MemorySpace.SMEM),           # gamma (1,1)
                # Reverse-time streaming: grid step c handles time-chunk nc-1-c.
                pl.BlockSpec((block_rows, LANE), lambda c: (num_chunks - 1 - c, 0)),
                pl.BlockSpec((block_rows, LANE), lambda c: (num_chunks - 1 - c, 0)),
            ],
            out_specs=pl.BlockSpec((1, 1), lambda c: (0, 0)),
            scratch_shapes=[
                pltpu.VMEM((1, LANE), jnp.float32),   # lane accumulator of logp*rewards_t
                pltpu.VMEM((1, 1), jnp.float32),      # carried suffix-of-rewards scalar
            ],
        ),
        compiler_params=pltpu.CompilerParams(
            dimension_semantics=("arbitrary",),       # sequential carried reduction
        ),
    )(gamma_arr, probs_p, rewards_p)
    return out[0, 0]


def reinforce_loss_ref(probs, rewards, gamma):
    """Float64 transcription of the PyTorch module (vectorized, for verification)."""
    p = np.asarray(probs, np.float64)
    r = np.asarray(rewards, np.float64)
    suffix = np.cumsum(r[::-1])[::-1] - r            # exclusive suffix sums
    rewards_t = r + gamma * suffix
    return -(np.log(p) * rewards_t).sum()


if __name__ == "__main__":
    key = jax.random.PRNGKey(0)
    k_p1, k_r1, k_p2, k_r2, k_p3, k_r3 = jax.random.split(key, 6)
    gamma = 0.99

    # Small case matching the module spec (trajectory length = 8).
    T = 8
    probs = jax.random.uniform(k_p1, (T,), jnp.float32, minval=0.05, maxval=0.95)
    rewards = jax.random.normal(k_r1, (T,), jnp.float32)
    loss = reinforce_loss(probs, rewards, gamma)
    jax.block_until_ready(loss)
    ref = reinforce_loss_ref(np.asarray(probs), np.asarray(rewards), gamma)
    assert np.allclose(np.asarray(loss), ref, rtol=1e-5, atol=1e-4), (loss, ref)

    # Medium trajectory: previously needed atol=20 (S*B - E cancellation); now tight.
    T2 = 3000
    probs2 = jax.random.uniform(k_p2, (T2,), jnp.float32, minval=0.05, maxval=0.95)
    rewards2 = jax.random.normal(k_r2, (T2,), jnp.float32)
    loss2 = reinforce_loss(probs2, rewards2, gamma)
    jax.block_until_ready(loss2)
    ref2 = reinforce_loss_ref(np.asarray(probs2), np.asarray(rewards2), gamma)
    assert np.allclose(np.asarray(loss2), ref2, rtol=2e-3, atol=0.1), (loss2, ref2)

    # Long trajectory: exercises multi-chunk reverse streaming + carried suffix scalar.
    T3 = 600_000
    probs3 = jax.random.uniform(k_p3, (T3,), jnp.float32, minval=0.05, maxval=0.95)
    rewards3 = jax.random.normal(k_r3, (T3,), jnp.float32)
    loss3 = reinforce_loss(probs3, rewards3, gamma)
    jax.block_until_ready(loss3)
    ref3 = reinforce_loss_ref(np.asarray(probs3), np.asarray(rewards3), gamma)
    assert np.allclose(np.asarray(loss3), ref3, rtol=2e-3, atol=1e3), (loss3, ref3)

    print("KERNEL_OK")
</pallas_src>

<mosaic_0001>
module attributes {stable_mosaic.version = 11 : i64} {
  func.func @kernel(%arg0: i32, %arg1: memref<1x1xf32, #tpu.memory_space<smem>>, %arg2: memref<8x128xf32, #tpu.memory_space<vmem>>, %arg3: memref<8x128xf32, #tpu.memory_space<vmem>>, %arg4: memref<1x1xf32, #tpu.memory_space<vmem>>, %arg5: memref<1x128xf32, #tpu.memory_space<vmem>>, %arg6: memref<1x1xf32, #tpu.memory_space<vmem>>) attributes {dimension_semantics = [#tpu.dimension_semantics<arbitrary>], iteration_bounds = array<i64: 1>, scalar_prefetch = 0 : i64, scratch_operands = 2 : i64, tpu.core_type = #tpu.core_type<tc>, window_params = [{transform_indices = @transform_0, window_bounds = array<i64: 1, 1>}, {transform_indices = @transform_1, window_bounds = array<i64: 8, 128>}, {transform_indices = @transform_2, window_bounds = array<i64: 8, 128>}, {pipeline_mode = #tpu.pipeline_mode<synchronous>, transform_indices = @transform_3, window_bounds = array<i64: 1, 1>}]} {
    %c0_i32 = arith.constant 0 : i32
    %0 = arith.cmpi eq, %arg0, %c0_i32 : i32
    %1 = arith.extui %0 : i1 to i32
    %c0_i32_0 = arith.constant 0 : i32
    %2 = arith.cmpi ne, %1, %c0_i32_0 : i32
    scf.if %2 {
      %cst_25 = arith.constant 0.000000e+00 : f32
      %47 = vector.broadcast %cst_25 : f32 to vector<1x128xf32>
      %c0_26 = arith.constant 0 : index
      %c0_27 = arith.constant 0 : index
      %48 = vector.load %arg5[%c0_26, %c0_27] : memref<1x128xf32, #tpu.memory_space<vmem>>, vector<1x128xf32>
      tpu.vector_store %arg5[%c0_26, %c0_27], %47 {strides = array<i32>} : memref<1x128xf32, #tpu.memory_space<vmem>>, vector<1x128xf32>,
      %cst_28 = arith.constant 0.000000e+00 : f32
      %49 = vector.broadcast %cst_28 : f32 to vector<1x1xf32>
      %c0_29 = arith.constant 0 : index
      %c0_30 = arith.constant 0 : index
      %50 = vector.load %arg6[%c0_29, %c0_30] : memref<1x1xf32, #tpu.memory_space<vmem>>, vector<1x1xf32>
      tpu.vector_store %arg6[%c0_29, %c0_30], %49 {strides = array<i32>} : memref<1x1xf32, #tpu.memory_space<vmem>>, vector<1x1xf32>,
    } else {
    }
    %c0 = arith.constant 0 : index
    %c0_1 = arith.constant 0 : index
    %3 = memref.load %arg1[%c0, %c0_1] : memref<1x1xf32, #tpu.memory_space<smem>>
    %4 = tpu.iota {dimensions = array<i32: 0>} : vector<128x128xi32>
    %5 = tpu.iota {dimensions = array<i32: 1>} : vector<128x128xi32>
    %6 = arith.cmpi sgt, %4, %5 : vector<128x128xi32>
    %cst = arith.constant 1.000000e+00 : f32
    %cst_2 = arith.constant 0.000000e+00 : f32
    %7 = vector.broadcast %cst : f32 to vector<128x128xf32>
    %8 = vector.broadcast %cst_2 : f32 to vector<128x128xf32>
    %9 = arith.select %6, %7, %8 : vector<128x128xi1>, vector<128x128xf32>
    %10 = tpu.iota {dimensions = array<i32: 0>} : vector<8x8xi32>
    %11 = tpu.iota {dimensions = array<i32: 1>} : vector<8x8xi32>
    %12 = arith.cmpi sgt, %11, %10 : vector<8x8xi32>
    %cst_3 = arith.constant 1.000000e+00 : f32
    %cst_4 = arith.constant 0.000000e+00 : f32
    %13 = vector.broadcast %cst_3 : f32 to vector<8x8xf32>
    %14 = vector.broadcast %cst_4 : f32 to vector<8x8xf32>
    %15 = arith.select %12, %13, %14 : vector<8x8xi1>, vector<8x8xf32>
    %c0_5 = arith.constant 0 : index
    %c0_6 = arith.constant 0 : index
    %16 = vector.load %arg6[%c0_5, %c0_6] : memref<1x1xf32, #tpu.memory_space<vmem>>, vector<1x1xf32>
    %cst_7 = arith.constant 0.000000e+00 : f32
    %17 = vector.broadcast %cst_7 : f32 to vector<1x128xf32>
    %c0_8 = arith.constant 0 : index
    %c0_9 = arith.constant 0 : index
    %18 = vector.load %arg3[%c0_8, %c0_9] : memref<8x128xf32, #tpu.memory_space<vmem>>, vector<8x128xf32>
    %c0_10 = arith.constant 0 : index
    %c0_11 = arith.constant 0 : index
    %19 = vector.load %arg2[%c0_10, %c0_11] : memref<8x128xf32, #tpu.memory_space<vmem>>, vector<8x128xf32>
    %20 = math.log %19 : vector<8x128xf32>
    %cst_12 = arith.constant dense<0.000000e+00> : vector<8x128xf32>
    %21 = tpu.matmul %18, %9, %cst_12 {dimension_numbers = #tpu.dot_dimension_numbers<[1], [0], [0], [1], [0, 0, 1, 1], [], []>} : vector<8x128xf32>, vector<128x128xf32>, vector<8x128xf32> -> vector<8x128xf32>
    %cst_13 = arith.constant dense<0.000000e+00> : vector<8xf32>
    %22 = vector.multi_reduction <add>, %18, %cst_13 [1] : vector<8x128xf32> to vector<8xf32>
    %23 = vector.shape_cast %22 : vector<8xf32> to vector<8x1xf32>
    %24 = vector.shape_cast %23 : vector<8x1xf32> to vector<8x1xf32>
    %25 = vector.broadcast %24 : vector<8x1xf32> to vector<8x128xf32>
    %cst_14 = arith.constant dense<0.000000e+00> : vector<8x128xf32>
    %26 = tpu.matmul %15, %25, %cst_14 {dimension_numbers = #tpu.dot_dimension_numbers<[1], [0], [0], [1], [0, 0, 1, 1], [], []>} : vector<8x8xf32>, vector<8x128xf32>, vector<8x128xf32> -> vector<8x128xf32>
    %27 = arith.addf %21, %26 : vector<8x128xf32>
    %28 = vector.broadcast %16 : vector<1x1xf32> to vector<8x128xf32>
    %29 = arith.addf %27, %28 : vector<8x128xf32>
    %30 = vector.broadcast %3 : f32 to vector<8x128xf32>
    %31 = arith.mulf %30, %29 : vector<8x128xf32>
    %32 = arith.addf %18, %31 : vector<8x128xf32>
    %33 = arith.mulf %20, %32 : vector<8x128xf32>
    %cst_15 = arith.constant dense<0.000000e+00> : vector<128xf32>
    %34 = vector.multi_reduction <add>, %33, %cst_15 [0] : vector<8x128xf32> to vector<128xf32>
    %35 = vector.shape_cast %34 : vector<128xf32> to vector<1x128xf32>
    %36 = arith.addf %17, %35 : vector<1x128xf32>
    %cst_16 = arith.constant dense<0.000000e+00> : vector<1xf32>
    %37 = vector.multi_reduction <add>, %23, %cst_16 [0] : vector<8x1xf32> to vector<1xf32>
    %38 = vector.shape_cast %37 : vector<1xf32> to vector<1x1xf32>
    %39 = arith.addf %16, %38 : vector<1x1xf32>
    %c0_17 = arith.constant 0 : index
    %c0_18 = arith.constant 0 : index
    %40 = vector.load %arg5[%c0_17, %c0_18] : memref<1x128xf32, #tpu.memory_space<vmem>>, vector<1x128xf32>
    %41 = arith.addf %40, %36 : vector<1x128xf32>
    %c0_19 = arith.constant 0 : index
    %c0_20 = arith.constant 0 : index
    %42 = vector.load %arg5[%c0_19, %c0_20] : memref<1x128xf32, #tpu.memory_space<vmem>>, vector<1x128xf32>
    tpu.vector_store %arg5[%c0_19, %c0_20], %41 {strides = array<i32>} : memref<1x128xf32, #tpu.memory_space<vmem>>, vector<1x128xf32>,
    %c0_21 = arith.constant 0 : index
    %c0_22 = arith.constant 0 : index
    %43 = vector.load %arg6[%c0_21, %c0_22] : memref<1x1xf32, #tpu.memory_space<vmem>>, vector<1x1xf32>
    tpu.vector_store %arg6[%c0_21, %c0_22], %39 {strides = array<i32>} : memref<1x1xf32, #tpu.memory_space<vmem>>, vector<1x1xf32>,
    %c0_i32_23 = arith.constant 0 : i32
    %44 = arith.cmpi eq, %arg0, %c0_i32_23 : i32
    %45 = arith.extui %44 : i1 to i32
    %c0_i32_24 = arith.constant 0 : i32
    %46 = arith.cmpi ne, %45, %c0_i32_24 : i32
    scf.if %46 {
      %c0_25 = arith.constant 0 : index
      %c0_26 = arith.constant 0 : index
      %47 = vector.load %arg5[%c0_25, %c0_26] : memref<1x128xf32, #tpu.memory_space<vmem>>, vector<1x128xf32>
      %cst_27 = arith.constant dense<0.000000e+00> : vector<1xf32>
      %48 = vector.multi_reduction <add>, %47, %cst_27 [1] : vector<1x128xf32> to vector<1xf32>
      %49 = vector.shape_cast %48 : vector<1xf32> to vector<1x1xf32>
      %cst_28 = arith.constant 0.000000e+00 : f32
      %50 = vector.broadcast %cst_28 : f32 to vector<1x1xf32>
      %51 = arith.subf %50, %49 : vector<1x1xf32>
      %c0_29 = arith.constant 0 : index
      %c0_30 = arith.constant 0 : index
      %52 = vector.load %arg4[%c0_29, %c0_30] : memref<1x1xf32, #tpu.memory_space<vmem>>, vector<1x1xf32>
      tpu.vector_store %arg4[%c0_29, %c0_30], %51 {strides = array<i32>} : memref<1x1xf32, #tpu.memory_space<vmem>>, vector<1x1xf32>,
    } else {
    }
    return
  }
  func.func @transform_0(%arg0: i32) -> (i32, i32) {
    %c0_i32 = arith.constant 0 : i32
    %c0_i32_0 = arith.constant 0 : i32
    %c0_i32_1 = arith.constant 0 : i32
    return %c0_i32, %c0_i32_0 : i32, i32
  }
  func.func @transform_1(%arg0: i32) -> (i32, i32) {
    %c0_i32 = arith.constant 0 : i32
    %0 = arith.subi %c0_i32, %arg0 : i32
    %c0_i32_0 = arith.constant 0 : i32
    %c0_i32_1 = arith.constant 0 : i32
    return %0, %c0_i32_0 : i32, i32
  }
  func.func @transform_2(%arg0: i32) -> (i32, i32) {
    %c0_i32 = arith.constant 0 : i32
    %0 = arith.subi %c0_i32, %arg0 : i32
    %c0_i32_0 = arith.constant 0 : i32
    %c0_i32_1 = arith.constant 0 : i32
    return %0, %c0_i32_0 : i32, i32
  }
  func.func @transform_3(%arg0: i32) -> (i32, i32) {
    %c0_i32 = arith.constant 0 : i32
    %c0_i32_0 = arith.constant 0 : i32
    %c0_i32_1 = arith.constant 0 : i32
    return %c0_i32, %c0_i32_0 : i32, i32
  }
}

</mosaic_0001>

<llo_original>
// kernel: tpu_custom_call.1
$region0: #{tpu_custom_call.1}
  #allocation0 [shape = 'u32[]', space=smem, size = 0x4, offset = 0x4, fixed_abs, tag = 'smem constant byte address 0x4 - core index']
  #allocation1 [shape = 'u32[72,128]{1,0:T(1,128)}', space=vmem, size = 0x9000, scoped, tag = 'internal scratch']
  #allocation2 [shape = 'f32[1,128]{1,0:T(1,128)}', space=vmem, size = 0x200, scoped, tag = 'scratch operand']
  #allocation3 [shape = 'f32[1,1]{1,0:T(1,128)}', space=vmem, size = 0x200, scoped, tag = 'scratch operand']
  #allocation4 [shape = 'f32[1,1]{1,0:T(1,128)S(6)}', space=smem, size = 0x200, scoped, tag = 'scoped memory for tpu_custom_call.1']
  %s0 = inlined_call_operand.<no memory space> [shape: f32[1,1], index: 0, kind: input, shape index: {}]
  %s1 = inlined_call_operand.hbm [shape: f32[8,128], index: 1, kind: input, shape index: {}]
  %s2 = inlined_call_operand.hbm [shape: f32[8,128], index: 2, kind: input, shape index: {}]
  %s3 = inlined_call_operand.hbm [shape: f32[1,1], index: 3, kind: output, shape index: {}]
  %s4 = sld [smem:[#allocation0]]
  $region38: #{tpu_custom_call.1} parent=0
    _
  %s6 = ssub.s32 1, %s4
  %s7 = scalar_select 0, %s6, %s4
  %8 = sst [smem:[#allocation4]] %s0
  $region1: #{tpu_custom_call.1} parent=0
    #allocation5 [shape = 'u8[4096]{0}', space=vmem, size = 0x1000, scoped, tag = 'input window, operand 1, single buffered']
    #allocation6 [shape = 's32[1]{0}', space=sflag, size = 0x4, scoped, tag = 'scoped memory for tpu_custom_call.1']
    #allocation7 [shape = 's32[1]{0}', space=sflag, size = 0x4, scoped, tag = 'scoped memory for tpu_custom_call.1']
    #allocation8 [shape = 'u8[4096]{0}', space=vmem, size = 0x1000, scoped, tag = 'input window, operand 2, single buffered']
    #allocation9 [shape = 's32[1]{0}', space=sflag, size = 0x4, scoped, tag = 'scoped memory for tpu_custom_call.1']
    #allocation10 [shape = 'u8[512]{0}', space=vmem, size = 0x400, scoped, tag = 'output window, operand 0, single buffered']
    %9 = vsyncpa [#allocation6], 0
    %10 = vsyncpa [#allocation9], 0
    %11 = vsyncpa [#allocation7], 0
    // Predicated region
    $region2: #{tpu_custom_call.1} parent=1 // pred_check
      _
    $region3: #{tpu_custom_call.1} parent=1 // pred_check_branch
      %13 = sbr.rel (0) target = $region5
    $region4: #{tpu_custom_call.1} parent=1 // pred_region
      _
    $region5: #{tpu_custom_call.1} parent=1 // pred_fallthru
      _
    // Predicated region
    $region6: #{tpu_custom_call.1} parent=1 // pred_check
      _
    $region7: #{tpu_custom_call.1} parent=1 // pred_check_branch
      %15 = sbr.rel (0) target = $region9
    $region8: #{tpu_custom_call.1} parent=1 // pred_region
      %s16 = ssub.s32 0, 0
      %18 = vsyncadd [#allocation6], 0
      %s19 = smul.addr %s16, 8
      %s20 = scalar_lea.hbm %s1, %s19
      %s22 = sshll.u32 %s20, 4
      %s23 = int_to_ptr.hbm [resolvable:$true] %s22
      %s24 = sshll.u32 [#allocation5], 4
      %s25 = int_to_ptr.vmem [resolvable:$true] %s24
      %27 = dma.hbm_to_vmem [thread:$0]  %s23, 128, %s25, [#allocation6]
    $region9: #{tpu_custom_call.1} parent=1 // pred_fallthru
      _
    // Predicated region
    $region10: #{tpu_custom_call.1} parent=1 // pred_check
      _
    $region11: #{tpu_custom_call.1} parent=1 // pred_check_branch
      %29 = sbr.rel (0) target = $region13
    $region12: #{tpu_custom_call.1} parent=1 // pred_region
      %s30 = ssub.s32 0, 0
      %32 = vsyncadd [#allocation9], 0
      %s33 = smul.addr %s30, 8
      %s34 = scalar_lea.hbm %s2, %s33
      %s36 = sshll.u32 %s34, 4
      %s37 = int_to_ptr.hbm [resolvable:$true] %s36
      %s38 = sshll.u32 [#allocation8], 4
      %s39 = int_to_ptr.vmem [resolvable:$true] %s38
      %41 = dma.hbm_to_vmem [thread:$0]  %s37, 128, %s39, [#allocation9]
    $region13: #{tpu_custom_call.1} parent=1 // pred_fallthru
      _
    // Predicated region
    $region14: #{tpu_custom_call.1} parent=1 // pred_check
      _
    $region15: #{tpu_custom_call.1} parent=1 // pred_check_branch
      %43 = sbr.rel (0) target = $region17
    $region16: #{tpu_custom_call.1} parent=1 // pred_region
      %45 = dma.done [#allocation6], 128
    $region17: #{tpu_custom_call.1} parent=1 // pred_fallthru
      _
    // Predicated region
    $region18: #{tpu_custom_call.1} parent=1 // pred_check
      _
    $region19: #{tpu_custom_call.1} parent=1 // pred_check_branch
      %47 = sbr.rel (0) target = $region21
    $region20: #{tpu_custom_call.1} parent=1 // pred_region
      %49 = dma.done [#allocation9], 128
    $region21: #{tpu_custom_call.1} parent=1 // pred_fallthru
      _
    %s50 = ssub.s32 0, 0
    %s51 = ssub.s32 0, 0
    %p52 = scmp.eq.s32.totalorder 0, 0
    // Predicated region
    $region22: #{tpu_custom_call.1} parent=1 // pred_check
      %p53 = pneg %p52
    $region23: #{tpu_custom_call.1} parent=1 // pred_check_branch
      %55 = sbr.rel (%p53) target = $region25
    $region24: #{tpu_custom_call.1} parent=1 // pred_region
      %56 = vst [vmem:[#allocation2] sm:$0x1] 0.0
      %vm57 = vcmask 0
      %58 = vst.msk [vmem:[#allocation3] sm:$0x1] %vm57, 0.0
    $region25: #{tpu_custom_call.1} parent=1 // pred_fallthru
      _
    %s59 = sld [smem:[#allocation4]]
    %v60 = vlaneseq
    %v61 = vshrl.u32 %v60, 7
    %v62 = vadd.s32 %v61, 8
    %v63 = vadd.s32 %v61, 16
    %v64 = vadd.s32 %v61, 24
    %v65 = vadd.s32 %v61, 32
    %v66 = vadd.s32 %v61, 40
    %v67 = vadd.s32 %v61, 48
    %v68 = vadd.s32 %v61, 56
    %v69 = vadd.s32 %v61, 64
    %v70 = vadd.s32 %v61, 72
    %v71 = vadd.s32 %v61, 80
    %v72 = vadd.s32 %v61, 88
    %v73 = vadd.s32 %v61, 96
    %v74 = vadd.s32 %v61, 104
    %v75 = vadd.s32 %v61, 112
    %v76 = vadd.s32 %v61, 120
    %v77 = vlaneseq
    %v78 = vand.u32 %v77, 127
    %vm79 = vcmp.gt.s32.totalorder %v61, %v78
    %vm80 = vcmp.gt.s32.totalorder %v62, %v78
    %vm81 = vcmp.gt.s32.totalorder %v63, %v78
    %vm82 = vcmp.gt.s32.totalorder %v64, %v78
    %vm83 = vcmp.gt.s32.totalorder %v65, %v78
    %vm84 = vcmp.gt.s32.totalorder %v66, %v78
    %vm85 = vcmp.gt.s32.totalorder %v67, %v78
    %vm86 = vcmp.gt.s32.totalorder %v68, %v78
    %vm87 = vcmp.gt.s32.totalorder %v69, %v78
    %vm88 = vcmp.gt.s32.totalorder %v70, %v78
    %vm89 = vcmp.gt.s32.totalorder %v71, %v78
    %vm90 = vcmp.gt.s32.totalorder %v72, %v78
    %vm91 = vcmp.gt.s32.totalorder %v73, %v78
    %vm92 = vcmp.gt.s32.totalorder %v74, %v78
    %vm93 = vcmp.gt.s32.totalorder %v75, %v78
    %vm94 = vcmp.gt.s32.totalorder %v76, %v78
    %v95 = vsel %vm79, 1.0, 0.0
    %v96 = vsel %vm80, 1.0, 0.0
    %v97 = vsel %vm81, 1.0, 0.0
    %v98 = vsel %vm82, 1.0, 0.0
    %v99 = vsel %vm83, 1.0, 0.0
    %v100 = vsel %vm84, 1.0, 0.0
    %v101 = vsel %vm85, 1.0, 0.0
    %v102 = vsel %vm86, 1.0, 0.0
    %v103 = vsel %vm87, 1.0, 0.0
    %v104 = vsel %vm88, 1.0, 0.0
    %v105 = vsel %vm89, 1.0, 0.0
    %v106 = vsel %vm90, 1.0, 0.0
    %v107 = vsel %vm91, 1.0, 0.0
    %v108 = vsel %vm92, 1.0, 0.0
    %v109 = vsel %vm93, 1.0, 0.0
    %v110 = vsel %vm94, 1.0, 0.0
    %vm111 = vcmp.gt.s32.totalorder %v78, %v61
    %v112 = vsel %vm111, 1.0, 0.0
    %v113 = vld [vmem:[#allocation3] sm:$0x1]
    %v114 = vld [vmem:[#allocation8] sm:$0xff]
    %v115 = vld [vmem:[#allocation5] sm:$0xff]
    %v116 = vlog2.pop %v115
    %v117 = vmul.f32 %v116, 0.6931472
    %118 = vadd.xlane.f32.xlu0 %v114
    %v119 = vpop.xlane.xlu0 %118
    %vm120 = vcmask 64512
    %v122 = vsel %vm120, %v112, 0
    %124 = vmatpush.msra.mxu0 0.0
    %125 = vmatpush.msra.mxu0 0.0
    %126 = vmatpush.msra.mxu0 0.0
    %127 = vmatpush.msra.mxu0 0.0
    %128 = vmatpush.msra.mxu0 0.0
    %129 = vmatpush.msra.mxu0 0.0
    %130 = vmatpush.msra.mxu0 0.0
    %131 = vmatpush.msra.mxu0 0.0
    %132 = vmatpush.msra.mxu0 0.0
    %133 = vmatpush.msra.mxu0 0.0
    %134 = vmatpush.msra.mxu0 0.0
    %135 = vmatpush.msra.mxu0 0.0
    %136 = vmatpush.msra.mxu0 0.0
    %137 = vmatpush.msra.mxu0 0.0
    %138 = vmatpush.msra.mxu0 0.0
    %139 = vmatpush.msra.mxu0 %v119
    %140 = vmatmul.f32.gmra.mxu0 %v122
    %v141 = vpop.f32.mrf.mxu0
    %v142 = vadd.f32 0.0, %v141
    %143 = vdwg.mxu0
    %144 = vmatpush.msra.mxu0 %v110
    %145 = vmatpush.msra.mxu0 %v109
    %146 = vmatpush.msra.mxu0 %v108
    %147 = vmatpush.msra.mxu0 %v107
    %148 = vmatpush.msra.mxu0 %v106
    %149 = vmatpush.msra.mxu0 %v105
    %150 = vmatpush.msra.mxu0 %v104
    %151 = vmatpush.msra.mxu0 %v103
    %152 = vmatpush.msra.mxu0 %v102
    %153 = vmatpush.msra.mxu0 %v101
    %154 = vmatpush.msra.mxu0 %v100
    %155 = vmatpush.msra.mxu0 %v99
    %156 = vmatpush.msra.mxu0 %v98
    %157 = vmatpush.msra.mxu0 %v97
    %158 = vmatpush.msra.mxu0 %v96
    %159 = vmatpush.msra.mxu0 %v95
    %160 = vmatmul.f32.gmra.mxu0 %v114
    %v161 = vpop.f32.mrf.mxu0
    %v162 = vadd.f32 %v142, %v161
    %163 = vdwg.mxu0
    %v165 = vperm.slane %v113, 0
    %166 = vset.pattern.permute.xlu0 0
    %167 = vperm.xlu0 %166, %v165
    %v168 = vpop.permute.xlu0 %167
    %v170 = vadd.f32 %v162, %v168
    %v171 = vstv %s59
    %v172 = vmul.f32 %v171, %v170
    %v173 = vadd.f32 %v114, %v172
    %v174 = vmul.f32 %v117, %v173
    %v175 = vrot.slane %v174, 4
    %v176 = vadd.f32 %v174, %v175
    %v177 = vrot.slane %v176, 2
    %v178 = vadd.f32 %v176, %v177
    %v179 = vrot.slane %v178, 1
    %v180 = vadd.f32 %v178, %v179
    %v181 = vadd.f32 %v180, 0.0
    %v182 = vrot.slane %v119, 4
    %v183 = vadd.f32 %v119, %v182
    %v184 = vrot.slane %v183, 2
    %v185 = vadd.f32 %v183, %v184
    %v186 = vrot.slane %v185, 1
    %v187 = vadd.f32 %v185, %v186
    %v188 = vadd.f32 %v113, %v187
    %v189 = vld [vmem:[#allocation2] sm:$0x1]
    %v190 = vadd.f32 %v189, %v181
    %191 = vst [vmem:[#allocation2] sm:$0x1] %v190
    %vm192 = vcmask 0
    %193 = vst.msk [vmem:[#allocation3] sm:$0x1] %vm192, %v188
    // Predicated region
    $region26: #{tpu_custom_call.1} parent=1 // pred_check
      %p194 = pneg %p52
    $region27: #{tpu_custom_call.1} parent=1 // pred_check_branch
      %196 = sbr.rel (%p194) target = $region29
    $region28: #{tpu_custom_call.1} parent=1 // pred_region
      %v197 = vld [vmem:[#allocation2] sm:$0x1]
      %vm198 = vcmask 1040384
      %v199 = vsel %vm198, %v197, 0.0
      %200 = vadd.xlane.f32.xlu0 %v199
      %v201 = vpop.xlane.xlu0 %200
      %v202 = vsub.f32 0.0, %v201
      %203 = vst.msk [vmem:[#allocation10] sm:$0x1] %vm192, %v202
    $region29: #{tpu_custom_call.1} parent=1 // pred_fallthru
      _
    // Predicated region
    $region30: #{tpu_custom_call.1} parent=1 // pred_check
      _
    $region31: #{tpu_custom_call.1} parent=1 // pred_check_branch
      %205 = sbr.rel (0) target = $region33
    $region32: #{tpu_custom_call.1} parent=1 // pred_region
      %207 = vsyncadd [#allocation7], 0
      %s209 = sshll.u32 [#allocation10], 4
      %s210 = int_to_ptr.vmem [resolvable:$true] %s209
      %s211 = sshll.u32 %s3, 4
      %s212 = int_to_ptr.hbm [resolvable:$true] %s211
      %214 = dma.vmem_to_hbm [thread:$0]  %s210, 16, %s212, [#allocation7]
    $region33: #{tpu_custom_call.1} parent=1 // pred_fallthru
      _
    // Predicated region
    $region34: #{tpu_custom_call.1} parent=1 // pred_check
      _
    $region35: #{tpu_custom_call.1} parent=1 // pred_check_branch
      %216 = sbr.rel (0) target = $region37
    $region36: #{tpu_custom_call.1} parent=1 // pred_region
      %218 = dma.done [#allocation7], 16
    $region37: #{tpu_custom_call.1} parent=1 // pred_fallthru
      _
    %219 = vsyncpa [#allocation6], 1
    %220 = vsyncpa [#allocation9], 1
    %221 = vsyncpa [#allocation7], 1

</llo_original>
